<compile_context>
chip_gen: v5e
topology: v5e:2x2
jax: 0.10.0
libtpu: 0.0.40
codegen_flags: <defaults>
</compile_context>

<pallas_src>
import functools

import jax
import jax.numpy as jnp
from jax import lax
from jax.experimental import pallas as pl
from jax.experimental.pallas import tpu as pltpu


def _residual_kernel(w_ref, b_ref, scale_ref, bias_ref, edge_ref, x_ref, o_ref,
                     *, H, W):
    # w_ref:     VMEM (C_blk, 9)   depthwise 3x3 taps, row-major (dy, dx)
    # b_ref:     VMEM (C_blk, 1)   conv bias
    # scale_ref: VMEM (C_blk, 1)   folded BN scale = gamma / sqrt(var + eps)
    # bias_ref:  VMEM (C_blk, 1)   folded BN bias  = beta - mean * scale
    # edge_ref:  VMEM (2, HW)      {0,1} masks: [0]=has left neighbour, [1]=has right
    # x_ref/o_ref: VMEM (1, C_blk, HW) lane-dense slab of the (N, C, H*W) view
    HW = H * W
    x = x_ref[0].astype(jnp.float32)                  # (C_blk, HW)

    # Hoist all per-channel parameters once per grid step.
    taps = w_ref[...].astype(jnp.float32)             # (C_blk, 9)
    b = b_ref[...].astype(jnp.float32)                # (C_blk, 1)
    scale = scale_ref[...].astype(jnp.float32)        # (C_blk, 1)
    bias = bias_ref[...].astype(jnp.float32)          # (C_blk, 1)
    left_ok = edge_ref[0:1, :]                        # (1, HW)
    right_ok = edge_ref[1:2, :]                       # (1, HW)

    # Zero-pad the flattened spatial axis: shift by dy*W+dx becomes a static
    # lane slice; out-of-image rows read the zero padding.
    P = W + 1
    xp = jnp.pad(x, ((0, 0), (P, P)))                 # (C_blk, HW + 2W + 2)

    acc = jnp.zeros_like(x)
    for dy in (-1, 0, 1):
        for dx in (-1, 0, 1):
            k = (dy + 1) * 3 + (dx + 1)
            off = dy * W + dx
            shifted = xp[:, P + off:P + off + HW]     # (C_blk, HW)
            if dx == -1:
                shifted = shifted * left_ok           # mask left-border wrap
            elif dx == 1:
                shifted = shifted * right_ok          # mask right-border wrap
            acc = acc + shifted * taps[:, k:k + 1]

    y = acc + b
    # Exact (erf-based) GELU, matching torch.nn.GELU() default.
    y = 0.5 * y * (1.0 + lax.erf(y * jnp.float32(0.7071067811865476)))
    # BatchNorm2d (inference) folded into per-channel scale/bias.
    y = y * scale + bias
    # Residual connection: fn(x) + x
    o_ref[0] = (y + x).astype(o_ref.dtype)


def _pick_c_blk(C, HW, itemsize, max_block_bytes=2 * 1024 * 1024):
    """Largest valid channel block that keeps one x/o slab under max_block_bytes."""
    cap = max(1, max_block_bytes // (HW * itemsize))
    if C <= cap:
        return C                       # whole channel dim (block == full dim is legal)
    for cb in range(min(C, cap), 0, -1):
        if C % cb == 0 and cb % 8 == 0:
            return cb
    return C


def residual_forward(x, w, b, gamma, beta, running_mean, running_var, eps=1e-5):
    """x: (N, C, H, W) f32; w: (C, 3, 3); b/gamma/beta/mean/var: (C,)."""
    N, C, H, W = x.shape
    HW = H * W

    # Fold BatchNorm (eval mode) into per-channel scale/bias.
    scale = gamma / jnp.sqrt(running_var + eps)
    bias = beta - running_mean * scale

    w2 = w.reshape(C, 9).astype(jnp.float32)
    b2 = b.reshape(C, 1).astype(jnp.float32)
    scale2 = scale.reshape(C, 1).astype(jnp.float32)
    bias2 = bias.reshape(C, 1).astype(jnp.float32)

    # Column-edge masks on the flattened spatial axis (shared across channels).
    cols = jnp.arange(HW, dtype=jnp.int32) % W
    edge = jnp.stack([cols >= 1, cols <= W - 2]).astype(jnp.float32)   # (2, HW)

    x3 = x.reshape(N, C, HW)                       # free view: lane-dense last dim
    c_blk = _pick_c_blk(C, HW, x.dtype.itemsize)

    kernel = functools.partial(_residual_kernel, H=H, W=W)
    out3 = pl.pallas_call(
        kernel,
        out_shape=jax.ShapeDtypeStruct((N, C, HW), x.dtype),
        grid=(N, C // c_blk),
        in_specs=[
            pl.BlockSpec((c_blk, 9), lambda n, c: (c, 0)),        # conv taps
            pl.BlockSpec((c_blk, 1), lambda n, c: (c, 0)),        # conv bias
            pl.BlockSpec((c_blk, 1), lambda n, c: (c, 0)),        # BN scale
            pl.BlockSpec((c_blk, 1), lambda n, c: (c, 0)),        # BN bias
            pl.BlockSpec((2, HW), lambda n, c: (0, 0)),           # edge masks
            pl.BlockSpec((1, c_blk, HW), lambda n, c: (n, c, 0)),  # x slab
        ],
        out_specs=pl.BlockSpec((1, c_blk, HW), lambda n, c: (n, c, 0)),
        compiler_params=pltpu.CompilerParams(
            dimension_semantics=("parallel", "parallel")),
    )(w2, b2, scale2, bias2, edge, x3)

    return out3.reshape(N, C, H, W)


def _reference(x, w, b, gamma, beta, running_mean, running_var, eps=1e-5):
    """Pure-JAX reference of Residual(depthwise-conv -> GELU -> BN)."""
    N, C, H, W = x.shape
    w_oihw = w.reshape(C, 1, 3, 3)
    y = lax.conv_general_dilated(
        x, w_oihw, window_strides=(1, 1), padding=((1, 1), (1, 1)),
        dimension_numbers=("NCHW", "OIHW", "NCHW"), feature_group_count=C)
    y = y + b.reshape(1, C, 1, 1)
    y = 0.5 * y * (1.0 + lax.erf(y / jnp.sqrt(2.0)))
    scale = gamma / jnp.sqrt(running_var + eps)
    bias = beta - running_mean * scale
    y = y * scale.reshape(1, C, 1, 1) + bias.reshape(1, C, 1, 1)
    return y + x


if __name__ == "__main__":
    key = jax.random.PRNGKey(0)
    kx, kw, kb = jax.random.split(key, 3)

    N, C, H, W = 2, 4, 16, 16
    x = jax.random.normal(kx, (N, C, H, W), dtype=jnp.float32)

    # Conv2d(C, C, 3, groups=C) + BatchNorm2d(C) parameters.
    w = jax.random.normal(kw, (C, 3, 3), dtype=jnp.float32) * 0.1
    b = jax.random.normal(kb, (C,), dtype=jnp.float32) * 0.1
    gamma = jnp.ones((C,), jnp.float32)
    beta = jnp.zeros((C,), jnp.float32)
    running_mean = jnp.zeros((C,), jnp.float32)
    running_var = jnp.ones((C,), jnp.float32)

    out = residual_forward(x, w, b, gamma, beta, running_mean, running_var)
    out = jax.block_until_ready(out)

    ref = _reference(x, w, b, gamma, beta, running_mean, running_var)
    assert out.shape == (N, C, H, W) and out.dtype == jnp.float32
    assert jnp.allclose(out, ref, atol=1e-5, rtol=1e-5), "mismatch vs reference"

    print("KERNEL_OK")
</pallas_src>

<mosaic_0001>
module attributes {stable_mosaic.version = 11 : i64} {
  func.func @_residual_kernel(%arg0: i32, %arg1: i32, %arg2: memref<4x9xf32, #tpu.memory_space<vmem>>, %arg3: memref<4x1xf32, #tpu.memory_space<vmem>>, %arg4: memref<4x1xf32, #tpu.memory_space<vmem>>, %arg5: memref<4x1xf32, #tpu.memory_space<vmem>>, %arg6: memref<2x256xf32, #tpu.memory_space<vmem>>, %arg7: memref<1x4x256xf32, #tpu.memory_space<vmem>>, %arg8: memref<1x4x256xf32, #tpu.memory_space<vmem>>) attributes {dimension_semantics = [#tpu.dimension_semantics<parallel>, #tpu.dimension_semantics<parallel>], iteration_bounds = array<i64: 2, 1>, scalar_prefetch = 0 : i64, scratch_operands = 0 : i64, tpu.core_type = #tpu.core_type<tc>, window_params = [{transform_indices = @transform_0, window_bounds = array<i64: 4, 9>}, {transform_indices = @transform_1, window_bounds = array<i64: 4, 1>}, {transform_indices = @transform_2, window_bounds = array<i64: 4, 1>}, {transform_indices = @transform_3, window_bounds = array<i64: 4, 1>}, {pipeline_mode = #tpu.pipeline_mode<synchronous>, transform_indices = @transform_4, window_bounds = array<i64: 2, 256>}, {transform_indices = @transform_5, window_bounds = array<i64: 1, 4, 256>}, {transform_indices = @transform_6, window_bounds = array<i64: 1, 4, 256>}]} {
    %c0 = arith.constant 0 : index
    %c0_0 = arith.constant 0 : index
    %c0_1 = arith.constant 0 : index
    %0 = vector.load %arg7[%c0, %c0_0, %c0_1] : memref<1x4x256xf32, #tpu.memory_space<vmem>>, vector<1x4x256xf32>
    %1 = vector.shape_cast %0 : vector<1x4x256xf32> to vector<4x256xf32>
    %c0_2 = arith.constant 0 : index
    %c0_3 = arith.constant 0 : index
    %2 = vector.load %arg2[%c0_2, %c0_3] : memref<4x9xf32, #tpu.memory_space<vmem>>, vector<4x9xf32>
    %c0_4 = arith.constant 0 : index
    %c0_5 = arith.constant 0 : index
    %3 = vector.load %arg3[%c0_4, %c0_5] : memref<4x1xf32, #tpu.memory_space<vmem>>, vector<4x1xf32>
    %c0_6 = arith.constant 0 : index
    %c0_7 = arith.constant 0 : index
    %4 = vector.load %arg4[%c0_6, %c0_7] : memref<4x1xf32, #tpu.memory_space<vmem>>, vector<4x1xf32>
    %c0_8 = arith.constant 0 : index
    %c0_9 = arith.constant 0 : index
    %5 = vector.load %arg5[%c0_8, %c0_9] : memref<4x1xf32, #tpu.memory_space<vmem>>, vector<4x1xf32>
    %c0_10 = arith.constant 0 : index
    %c0_11 = arith.constant 0 : index
    %6 = vector.load %arg6[%c0_10, %c0_11] : memref<2x256xf32, #tpu.memory_space<vmem>>, vector<1x256xf32>
    %c1 = arith.constant 1 : index
    %c0_12 = arith.constant 0 : index
    %7 = vector.load %arg6[%c1, %c0_12] : memref<2x256xf32, #tpu.memory_space<vmem>>, vector<1x256xf32>
    %c0_i32 = arith.constant 0 : i32
    %8 = arith.sitofp %c0_i32 : i32 to f32
    %9 = vector.broadcast %8 : f32 to vector<4x17xf32>
    %10 = tpu.concatenate %9, %1 in 1 : vector<4x17xf32>, vector<4x256xf32> -> vector<4x273xf32>
    %11 = vector.broadcast %8 : f32 to vector<4x17xf32>
    %12 = tpu.concatenate %10, %11 in 1 : vector<4x273xf32>, vector<4x17xf32> -> vector<4x290xf32>
    %cst = arith.constant 0.000000e+00 : f32
    %13 = vector.broadcast %cst : f32 to vector<4x256xf32>
    %14 = vector.extract_strided_slice %12 {offsets = [0, 0], sizes = [4, 256], strides = [1, 1]} : vector<4x290xf32> to vector<4x256xf32>
    %15 = vector.broadcast %6 : vector<1x256xf32> to vector<4x256xf32>
    %16 = arith.mulf %14, %15 : vector<4x256xf32>
    %17 = vector.extract_strided_slice %2 {offsets = [0, 0], sizes = [4, 1], strides = [1, 1]} : vector<4x9xf32> to vector<4x1xf32>
    %18 = vector.broadcast %17 : vector<4x1xf32> to vector<4x256xf32>
    %19 = arith.mulf %16, %18 : vector<4x256xf32>
    %20 = arith.addf %13, %19 : vector<4x256xf32>
    %21 = vector.extract_strided_slice %12 {offsets = [0, 1], sizes = [4, 256], strides = [1, 1]} : vector<4x290xf32> to vector<4x256xf32>
    %22 = vector.extract_strided_slice %2 {offsets = [0, 1], sizes = [4, 1], strides = [1, 1]} : vector<4x9xf32> to vector<4x1xf32>
    %23 = vector.broadcast %22 : vector<4x1xf32> to vector<4x256xf32>
    %24 = arith.mulf %21, %23 : vector<4x256xf32>
    %25 = arith.addf %20, %24 : vector<4x256xf32>
    %26 = vector.extract_strided_slice %12 {offsets = [0, 2], sizes = [4, 256], strides = [1, 1]} : vector<4x290xf32> to vector<4x256xf32>
    %27 = vector.broadcast %7 : vector<1x256xf32> to vector<4x256xf32>
    %28 = arith.mulf %26, %27 : vector<4x256xf32>
    %29 = vector.extract_strided_slice %2 {offsets = [0, 2], sizes = [4, 1], strides = [1, 1]} : vector<4x9xf32> to vector<4x1xf32>
    %30 = vector.broadcast %29 : vector<4x1xf32> to vector<4x256xf32>
    %31 = arith.mulf %28, %30 : vector<4x256xf32>
    %32 = arith.addf %25, %31 : vector<4x256xf32>
    %33 = vector.extract_strided_slice %12 {offsets = [0, 16], sizes = [4, 256], strides = [1, 1]} : vector<4x290xf32> to vector<4x256xf32>
    %34 = vector.broadcast %6 : vector<1x256xf32> to vector<4x256xf32>
    %35 = arith.mulf %33, %34 : vector<4x256xf32>
    %36 = vector.extract_strided_slice %2 {offsets = [0, 3], sizes = [4, 1], strides = [1, 1]} : vector<4x9xf32> to vector<4x1xf32>
    %37 = vector.broadcast %36 : vector<4x1xf32> to vector<4x256xf32>
    %38 = arith.mulf %35, %37 : vector<4x256xf32>
    %39 = arith.addf %32, %38 : vector<4x256xf32>
    %40 = vector.extract_strided_slice %12 {offsets = [0, 17], sizes = [4, 256], strides = [1, 1]} : vector<4x290xf32> to vector<4x256xf32>
    %41 = vector.extract_strided_slice %2 {offsets = [0, 4], sizes = [4, 1], strides = [1, 1]} : vector<4x9xf32> to vector<4x1xf32>
    %42 = vector.broadcast %41 : vector<4x1xf32> to vector<4x256xf32>
    %43 = arith.mulf %40, %42 : vector<4x256xf32>
    %44 = arith.addf %39, %43 : vector<4x256xf32>
    %45 = vector.extract_strided_slice %12 {offsets = [0, 18], sizes = [4, 256], strides = [1, 1]} : vector<4x290xf32> to vector<4x256xf32>
    %46 = vector.broadcast %7 : vector<1x256xf32> to vector<4x256xf32>
    %47 = arith.mulf %45, %46 : vector<4x256xf32>
    %48 = vector.extract_strided_slice %2 {offsets = [0, 5], sizes = [4, 1], strides = [1, 1]} : vector<4x9xf32> to vector<4x1xf32>
    %49 = vector.broadcast %48 : vector<4x1xf32> to vector<4x256xf32>
    %50 = arith.mulf %47, %49 : vector<4x256xf32>
    %51 = arith.addf %44, %50 : vector<4x256xf32>
    %52 = vector.extract_strided_slice %12 {offsets = [0, 32], sizes = [4, 256], strides = [1, 1]} : vector<4x290xf32> to vector<4x256xf32>
    %53 = vector.broadcast %6 : vector<1x256xf32> to vector<4x256xf32>
    %54 = arith.mulf %52, %53 : vector<4x256xf32>
    %55 = vector.extract_strided_slice %2 {offsets = [0, 6], sizes = [4, 1], strides = [1, 1]} : vector<4x9xf32> to vector<4x1xf32>
    %56 = vector.broadcast %55 : vector<4x1xf32> to vector<4x256xf32>
    %57 = arith.mulf %54, %56 : vector<4x256xf32>
    %58 = arith.addf %51, %57 : vector<4x256xf32>
    %59 = vector.extract_strided_slice %12 {offsets = [0, 33], sizes = [4, 256], strides = [1, 1]} : vector<4x290xf32> to vector<4x256xf32>
    %60 = vector.extract_strided_slice %2 {offsets = [0, 7], sizes = [4, 1], strides = [1, 1]} : vector<4x9xf32> to vector<4x1xf32>
    %61 = vector.broadcast %60 : vector<4x1xf32> to vector<4x256xf32>
    %62 = arith.mulf %59, %61 : vector<4x256xf32>
    %63 = arith.addf %58, %62 : vector<4x256xf32>
    %64 = vector.extract_strided_slice %12 {offsets = [0, 34], sizes = [4, 256], strides = [1, 1]} : vector<4x290xf32> to vector<4x256xf32>
    %65 = vector.broadcast %7 : vector<1x256xf32> to vector<4x256xf32>
    %66 = arith.mulf %64, %65 : vector<4x256xf32>
    %67 = vector.extract_strided_slice %2 {offsets = [0, 8], sizes = [4, 1], strides = [1, 1]} : vector<4x9xf32> to vector<4x1xf32>
    %68 = vector.broadcast %67 : vector<4x1xf32> to vector<4x256xf32>
    %69 = arith.mulf %66, %68 : vector<4x256xf32>
    %70 = arith.addf %63, %69 : vector<4x256xf32>
    %71 = vector.broadcast %3 : vector<4x1xf32> to vector<4x256xf32>
    %72 = arith.addf %70, %71 : vector<4x256xf32>
    %cst_13 = arith.constant 5.000000e-01 : f32
    %73 = vector.broadcast %cst_13 : f32 to vector<4x256xf32>
    %74 = arith.mulf %73, %72 : vector<4x256xf32>
    %cst_14 = arith.constant 0.707106769 : f32
    %75 = vector.broadcast %cst_14 : f32 to vector<4x256xf32>
    %76 = arith.mulf %72, %75 : vector<4x256xf32>
    %77 = math.erf %76 : vector<4x256xf32>
    %cst_15 = arith.constant 1.000000e+00 : f32
    %78 = vector.broadcast %cst_15 : f32 to vector<4x256xf32>
    %79 = arith.addf %78, %77 : vector<4x256xf32>
    %80 = arith.mulf %74, %79 : vector<4x256xf32>
    %81 = vector.broadcast %4 : vector<4x1xf32> to vector<4x256xf32>
    %82 = arith.mulf %80, %81 : vector<4x256xf32>
    %83 = vector.broadcast %5 : vector<4x1xf32> to vector<4x256xf32>
    %84 = arith.addf %82, %83 : vector<4x256xf32>
    %85 = arith.addf %84, %1 : vector<4x256xf32>
    %c0_16 = arith.constant 0 : index
    %c0_17 = arith.constant 0 : index
    %c0_18 = arith.constant 0 : index
    %86 = vector.load %arg8[%c0_16, %c0_17, %c0_18] : memref<1x4x256xf32, #tpu.memory_space<vmem>>, vector<1x4x256xf32>
    %87 = vector.shape_cast %86 : vector<1x4x256xf32> to vector<4x256xf32>
    %88 = vector.shape_cast %85 : vector<4x256xf32> to vector<1x4x256xf32>
    tpu.vector_store %arg8[%c0_16, %c0_17, %c0_18], %88 {strides = array<i32>} : memref<1x4x256xf32, #tpu.memory_space<vmem>>, vector<1x4x256xf32>,
    return
  }
  func.func @transform_0(%arg0: i32, %arg1: i32) -> (i32, i32) {
    %c0_i32 = arith.constant 0 : i32
    %c0_i32_0 = arith.constant 0 : i32
    return %arg1, %c0_i32 : i32, i32
  }
  func.func @transform_1(%arg0: i32, %arg1: i32) -> (i32, i32) {
    %c0_i32 = arith.constant 0 : i32
    %c0_i32_0 = arith.constant 0 : i32
    return %arg1, %c0_i32 : i32, i32
  }
  func.func @transform_2(%arg0: i32, %arg1: i32) -> (i32, i32) {
    %c0_i32 = arith.constant 0 : i32
    %c0_i32_0 = arith.constant 0 : i32
    return %arg1, %c0_i32 : i32, i32
  }
  func.func @transform_3(%arg0: i32, %arg1: i32) -> (i32, i32) {
    %c0_i32 = arith.constant 0 : i32
    %c0_i32_0 = arith.constant 0 : i32
    return %arg1, %c0_i32 : i32, i32
  }
  func.func @transform_4(%arg0: i32, %arg1: i32) -> (i32, i32) {
    %c0_i32 = arith.constant 0 : i32
    %c0_i32_0 = arith.constant 0 : i32
    %c0_i32_1 = arith.constant 0 : i32
    return %c0_i32, %c0_i32_0 : i32, i32
  }
  func.func @transform_5(%arg0: i32, %arg1: i32) -> (i32, i32, i32) {
    %c0_i32 = arith.constant 0 : i32
    %c0_i32_0 = arith.constant 0 : i32
    return %arg0, %arg1, %c0_i32 : i32, i32, i32
  }
  func.func @transform_6(%arg0: i32, %arg1: i32) -> (i32, i32, i32) {
    %c0_i32 = arith.constant 0 : i32
    %c0_i32_0 = arith.constant 0 : i32
    return %arg0, %arg1, %c0_i32 : i32, i32, i32
  }
}

</mosaic_0001>

<llo_original>
// kernel: tpu_custom_call.1
$region0: #{tpu_custom_call.1}
  #allocation0 [shape = 'u32[]', space=smem, size = 0x4, offset = 0x4, fixed_abs, tag = 'smem constant byte address 0x4 - core index']
  #allocation1 [shape = 'u32[72,128]{1,0:T(1,128)}', space=vmem, size = 0x9000, scoped, tag = 'internal scratch']
  %s0 = inlined_call_operand.vmem [shape: f32[4,9], index: 0, kind: input, shape index: {}]
  %s1 = inlined_call_operand.vmem [shape: f32[4,1], index: 1, kind: input, shape index: {}]
  %s2 = inlined_call_operand.vmem [shape: f32[4,1], index: 2, kind: input, shape index: {}]
  %s3 = inlined_call_operand.vmem [shape: f32[4,1], index: 3, kind: input, shape index: {}]
  %s4 = inlined_call_operand.vmem [shape: f32[2,256], index: 4, kind: input, shape index: {}]
  %s5 = inlined_call_operand.hbm [shape: f32[2,4,256], index: 5, kind: input, shape index: {}]
  %s6 = inlined_call_operand.hbm [shape: f32[2,4,256], index: 6, kind: output, shape index: {}]
  %s7 = sld [smem:[#allocation0]]
  $region61: #{tpu_custom_call.1} parent=0
    _
  %s9 = ssub.s32 1, %s7
  %s10 = scalar_select 0, %s9, %s7
  $region1: #{tpu_custom_call.1} parent=0
    #allocation2 [shape = 'u8[8192]{0}', space=vmem, size = 0x2000, scoped, tag = 'input window, operand 5']
    #allocation3 [shape = 's32[2]{0}', space=sflag, size = 0x8, scoped, tag = 'scoped memory for tpu_custom_call.1']
    #allocation4 [shape = 's32[2]{0}', space=sflag, size = 0x8, scoped, tag = 'scoped memory for tpu_custom_call.1']
    #allocation5 [shape = 'u8[8192]{0}', space=vmem, size = 0x2000, scoped, tag = 'output window, operand 0']
    %11 = vsyncpa [#allocation3], 0
    %s12 = scalar_lea.sflag [#allocation3], 1
    %13 = vsyncpa %s12, 0
    %14 = vsyncpa [#allocation4], 0
    %s15 = scalar_lea.sflag [#allocation4], 1
    %16 = vsyncpa %s15, 0
    loop: start=0, step=1, limit=4
    $region2: #{tpu_custom_call.1} parent=1 // loop_pre_header
      _
    $region3: #{tpu_custom_call.1} parent=1 // loop_header
      %s18 = sphi 0, %s22
      %p19 = scmp.ge.s32.totalorder %s18, 4
      %s25 = sphi 0, %s37
      %s26 = sphi 0, %s33
      %s27 = sphi 0, %s25
      %s28 = sphi 0, %s26
      %s29 = sphi 0, %s27
      %s30 = sphi 0, %s28
      %s40 = sphi 0, %s42
      %s43 = sphi 0, %s40
      %s44 = sphi 0, %s43
      %s60 = sphi 0, %s44
      %s66 = sphi 0, %s68
      %s69 = sphi 0, %s66
      %s70 = sphi 0, %s69
      %s86 = sphi 0, %s70
      %s92 = sphi 0, %s94
      %s95 = sphi 0, %s92
      %s96 = sphi 0, %s95
      %s112 = sphi 0, %s96
      %s118 = sphi 0, %s120
      %s121 = sphi 0, %s118
      %s122 = sphi 0, %s121
      %s138 = sphi 0, %s122
      %s142 = sphi 0, %s142
      %s144 = sphi 0, %s142
      %s145 = sphi 0, %s144
      %s159 = sphi 0, %s145
      %s167 = sphi 0, %s169
      %s170 = sphi 0, %s167
      %s171 = sphi 0, %s170
      %s187 = sphi 0, %s171
      %s195 = sphi 0, %s197
      %s198 = sphi 0, %s195
      %s199 = sphi 0, %s198
      %s215 = sphi 0, %s199
    $region4: #{tpu_custom_call.1} parent=1 // loop_header_branch
      %21 = sbr.rel (%p19) target = $region8
    $region5: #{tpu_custom_call.1} parent=1 // loop_body
      %s23 = ssub.s32 %s18, 1
      %s24 = ssub.s32 %s18, 2
      %s31 = sadd.s32 1, %s26
      %p32 = scmp.ge.s32.totalorder %s31, 1
      %s33 = scalar_select %p32, 0, %s31
      %s34 = sadd.s32 1, %s25
      %s35 = scalar_select %p32, %s34, %s25
      %p36 = scmp.ge.s32.totalorder %s35, 2
      %s37 = scalar_select %p36, 0, %s35
      %s38 = ssub.s32 %s26, %s33
      %p39 = scmp.eq.s32.totalorder %s38, 0
      %s41 = sadd.s32 %s40, 1
      %s42 = scalar_select %p39, %s40, %s41
      %p45 = pneg %p39
      %p46 = scmp.eq.s32.totalorder %s18, 1
      %p47 = por %p45, %p46
      %p48 = scmp.ne.s32.totalorder %s40, %s43
      %p49 = scmp.eq.s32.totalorder %s18, 0
      %p50 = por %p48, %p49
      %p51 = scmp.ne.s32.totalorder %s40, %s43
      %p52 = scmp.eq.s32.totalorder %s23, 1
      %p53 = por %p51, %p52
      %p54 = scmp.ne.s32.totalorder %s43, %s44
      %p55 = scmp.eq.s32.totalorder %s23, 0
      %p56 = por %p54, %p55
      %p57 = scmp.ne.s32.totalorder %s43, %s44
      %p58 = scmp.eq.s32.totalorder %s24, 1
      %p59 = por %p57, %p58
      %p61 = scmp.ne.s32.totalorder %s44, %s60
      %p62 = scmp.eq.s32.totalorder %s24, 0
      %p63 = por %p61, %p62
      %s64 = ssub.s32 %s26, %s33
      %p65 = scmp.eq.s32.totalorder %s64, 0
      %s67 = sadd.s32 %s66, 1
      %s68 = scalar_select %p65, %s66, %s67
      %p71 = pneg %p65
      %p72 = scmp.eq.s32.totalorder %s18, 1
      %p73 = por %p71, %p72
      %p74 = scmp.ne.s32.totalorder %s66, %s69
      %p75 = scmp.eq.s32.totalorder %s18, 0
      %p76 = por %p74, %p75
      %p77 = scmp.ne.s32.totalorder %s66, %s69
      %p78 = scmp.eq.s32.totalorder %s23, 1
      %p79 = por %p77, %p78
      %p80 = scmp.ne.s32.totalorder %s69, %s70
      %p81 = scmp.eq.s32.totalorder %s23, 0
      %p82 = por %p80, %p81
      %p83 = scmp.ne.s32.totalorder %s69, %s70
      %p84 = scmp.eq.s32.totalorder %s24, 1
      %p85 = por %p83, %p84
      %p87 = scmp.ne.s32.totalorder %s70, %s86
      %p88 = scmp.eq.s32.totalorder %s24, 0
      %p89 = por %p87, %p88
      %s90 = ssub.s32 %s26, %s33
      %p91 = scmp.eq.s32.totalorder %s90, 0
      %s93 = sadd.s32 %s92, 1
      %s94 = scalar_select %p91, %s92, %s93
      %p97 = pneg %p91
      %p98 = scmp.eq.s32.totalorder %s18, 1
      %p99 = por %p97, %p98
      %p100 = scmp.ne.s32.totalorder %s92, %s95
      %p101 = scmp.eq.s32.totalorder %s18, 0
      %p102 = por %p100, %p101
      %p103 = scmp.ne.s32.totalorder %s92, %s95
      %p104 = scmp.eq.s32.totalorder %s23, 1
      %p105 = por %p103, %p104
      %p106 = scmp.ne.s32.totalorder %s95, %s96
      %p107 = scmp.eq.s32.totalorder %s23, 0
      %p108 = por %p106, %p107
      %p109 = scmp.ne.s32.totalorder %s95, %s96
      %p110 = scmp.eq.s32.totalorder %s24, 1
      %p111 = por %p109, %p110
      %p113 = scmp.ne.s32.totalorder %s96, %s112
      %p114 = scmp.eq.s32.totalorder %s24, 0
      %p115 = por %p113, %p114
      %s116 = ssub.s32 %s26, %s33
      %p117 = scmp.eq.s32.totalorder %s116, 0
      %s119 = sadd.s32 %s118, 1
      %s120 = scalar_select %p117, %s118, %s119
      %p123 = pneg %p117
      %p124 = scmp.eq.s32.totalorder %s18, 1
      %p125 = por %p123, %p124
      %p126 = scmp.ne.s32.totalorder %s118, %s121
      %p127 = scmp.eq.s32.totalorder %s18, 0
      %p128 = por %p126, %p127
      %p129 = scmp.ne.s32.totalorder %s118, %s121
      %p130 = scmp.eq.s32.totalorder %s23, 1
      %p131 = por %p129, %p130
      %p132 = scmp.ne.s32.totalorder %s121, %s122
      %p133 = scmp.eq.s32.totalorder %s23, 0
      %p134 = por %p132, %p133
      %p135 = scmp.ne.s32.totalorder %s121, %s122
      %p136 = scmp.eq.s32.totalorder %s24, 1
      %p137 = por %p135, %p136
      %p139 = scmp.ne.s32.totalorder %s122, %s138
      %p140 = scmp.eq.s32.totalorder %s24, 0
      %p141 = por %p139, %p140
      %s143 = sadd.s32 %s142, 1
      %p146 = scmp.eq.s32.totalorder %s18, 1
      %p147 = scmp.ne.s32.totalorder %s142, %s144
      %p148 = scmp.eq.s32.totalorder %s18, 0
      %p149 = por %p147, %p148
      %p150 = scmp.ne.s32.totalorder %s142, %s144
      %p151 = scmp.eq.s32.totalorder %s23, 1
      %p152 = por %p150, %p151
      %p153 = scmp.ne.s32.totalorder %s144, %s145
      %p154 = scmp.eq.s32.totalorder %s23, 0
      %p155 = por %p153, %p154
      %p156 = scmp.ne.s32.totalorder %s144, %s145
      %p157 = scmp.eq.s32.totalorder %s24, 1
      %p158 = por %p156, %p157
      %p160 = scmp.ne.s32.totalorder %s145, %s159
      %p161 = scmp.eq.s32.totalorder %s24, 0
      %p162 = por %p160, %p161
      %s163 = ssub.s32 %s25, %s37
      %s164 = ssub.s32 %s26, %s33
      %s165 = sor.u32 %s163, %s164
      %p166 = scmp.eq.s32.totalorder %s165, 0
      %s168 = sadd.s32 %s167, 1
      %s169 = scalar_select %p166, %s167, %s168
      %p172 = pneg %p166
      %p173 = scmp.eq.s32.totalorder %s18, 1
      %p174 = por %p172, %p173
      %p175 = scmp.ne.s32.totalorder %s167, %s170
      %p176 = scmp.eq.s32.totalorder %s18, 0
      %p177 = por %p175, %p176
      %p178 = scmp.ne.s32.totalorder %s167, %s170
      %p179 = scmp.eq.s32.totalorder %s23, 1
      %p180 = por %p178, %p179
      %p181 = scmp.ne.s32.totalorder %s170, %s171
      %p182 = scmp.eq.s32.totalorder %s23, 0
      %p183 = por %p181, %p182
      %p184 = scmp.ne.s32.totalorder %s170, %s171
      %p185 = scmp.eq.s32.totalorder %s24, 1
      %p186 = por %p184, %p185
      %p188 = scmp.ne.s32.totalorder %s171, %s187
      %p189 = scmp.eq.s32.totalorder %s24, 0
      %p190 = por %p188, %p189
      %s191 = ssub.s32 %s25, %s37
      %s192 = ssub.s32 %s26, %s33
      %s193 = sor.u32 %s191, %s192
      %p194 = scmp.eq.s32.totalorder %s193, 0
      %s196 = sadd.s32 %s195, 1
      %s197 = scalar_select %p194, %s195, %s196
      %p200 = pneg %p194
      %p201 = scmp.eq.s32.totalorder %s18, 1
      %p202 = por %p200, %p201
      %p203 = scmp.ne.s32.totalorder %s195, %s198
      %p204 = scmp.eq.s32.totalorder %s18, 0
      %p205 = por %p203, %p204
      %p206 = scmp.ne.s32.totalorder %s195, %s198
      %p207 = scmp.eq.s32.totalorder %s23, 1
      %p208 = por %p206, %p207
      %p209 = scmp.ne.s32.totalorder %s198, %s199
      %p210 = scmp.eq.s32.totalorder %s23, 0
      %p211 = por %p209, %p210
      %p212 = scmp.ne.s32.totalorder %s198, %s199
      %p213 = scmp.eq.s32.totalorder %s24, 1
      %p214 = por %p212, %p213
      %p216 = scmp.ne.s32.totalorder %s199, %s215
      %p217 = scmp.eq.s32.totalorder %s24, 0
      %p218 = por %p216, %p217
      %p219 = scmp.le.s32.totalorder 1, %s18
      %p220 = scmp.lt.s32.totalorder %s18, 3
      %p221 = pnand %p219, %p220
      %p222 = pneg %p221
      // Predicated region
      $region9: #{tpu_custom_call.1} parent=5 // pred_check
        _
      $region10: #{tpu_custom_call.1} parent=5 // pred_check_branch
        %224 = sbr.rel (%p221) target = $region12
      $region11: #{tpu_custom_call.1} parent=5 // pred_region
        %s225 = ssub.s32 %s18, 1
        // Predicated region
        $region13: #{tpu_custom_call.1} parent=11 // pred_check
          %p226 = pneg %p56
        $region14: #{tpu_custom_call.1} parent=11 // pred_check_branch
          %228 = sbr.rel (%p226) target = $region16
        $region15: #{tpu_custom_call.1} parent=11 // pred_region
          %p229 = scmp.lt.s32.totalorder %s28, 0
          %s230 = scalar_select %p229, %s28, 0
          %s231 = smul.addr %s230, 4
          %s232 = scalar_lea.vmem %s0, %s231
        $region16: #{tpu_custom_call.1} parent=11 // pred_fallthru
          _
        // Predicated region
        $region17: #{tpu_custom_call.1} parent=11 // pred_check
          %p233 = pneg %p82
        $region18: #{tpu_custom_call.1} parent=11 // pred_check_branch
          %235 = sbr.rel (%p233) target = $region20
        $region19: #{tpu_custom_call.1} parent=11 // pred_region
          %p236 = scmp.lt.s32.totalorder %s28, 0
          %s237 = scalar_select %p236, %s28, 0
          %s238 = smul.addr %s237, 4
          %s239 = scalar_lea.vmem %s1, %s238
        $region20: #{tpu_custom_call.1} parent=11 // pred_fallthru
          _
        // Predicated region
        $region21: #{tpu_custom_call.1} parent=11 // pred_check
          %p240 = pneg %p108
        $region22: #{tpu_custom_call.1} parent=11 // pred_check_branch
          %242 = sbr.rel (%p240) target = $region24
        $region23: #{tpu_custom_call.1} parent=11 // pred_region
          %p243 = scmp.lt.s32.totalorder %s28, 0
          %s244 = scalar_select %p243, %s28, 0
          %s245 = smul.addr %s244, 4
          %s246 = scalar_lea.vmem %s2, %s245
        $region24: #{tpu_custom_call.1} parent=11 // pred_fallthru
          _
        // Predicated region
        $region25: #{tpu_custom_call.1} parent=11 // pred_check
          %p247 = pneg %p134
        $region26: #{tpu_custom_call.1} parent=11 // pred_check_branch
          %249 = sbr.rel (%p247) target = $region28
        $region27: #{tpu_custom_call.1} parent=11 // pred_region
          %p250 = scmp.lt.s32.totalorder %s28, 0
          %s251 = scalar_select %p250, %s28, 0
          %s252 = smul.addr %s251, 4
          %s253 = scalar_lea.vmem %s3, %s252
        $region28: #{tpu_custom_call.1} parent=11 // pred_fallthru
          _
        // Predicated region
        $region29: #{tpu_custom_call.1} parent=11 // pred_check
          %p254 = pneg %p155
        $region30: #{tpu_custom_call.1} parent=11 // pred_check_branch
          %256 = sbr.rel (%p254) target = $region32
        $region31: #{tpu_custom_call.1} parent=11 // pred_region
          _
        $region32: #{tpu_custom_call.1} parent=11 // pred_fallthru
          _
      $region12: #{tpu_custom_call.1} parent=5 // pred_fallthru
        _
      %p257 = scmp.lt.s32.totalorder %s18, 2
      // Predicated region
      $region33: #{tpu_custom_call.1} parent=5 // pred_check
        %p258 = pneg %p257
      $region34: #{tpu_custom_call.1} parent=5 // pred_check_branch
        %260 = sbr.rel (%p258) target = $region36
      $region35: #{tpu_custom_call.1} parent=5 // pred_region
        // Predicated region
        $region37: #{tpu_custom_call.1} parent=35 // pred_check
          %p261 = pneg %p177
        $region38: #{tpu_custom_call.1} parent=35 // pred_check_branch
          %263 = sbr.rel (%p261) target = $region40
        $region39: #{tpu_custom_call.1} parent=35 // pred_region
          %s264 = sand.u32 %s167, 1
          %s265 = scalar_lea.sflag [#allocation3], %s264
          %s266 = sand.u32 %s167, 1
          %s267 = smul.addr %s266, 8
          %s268 = scalar_lea.vmem [#allocation2], %s267
          %270 = vsyncadd %s265, 0
          %s271 = smul.addr %s26, 2
          %s272 = smul.addr %s25, 2
          %s273 = sadd.s32 %s271, %s272
          %s274 = smul.addr %s273, 4
          %s275 = scalar_lea.hbm %s5, %s274
          %s277 = sshll.u32 %s275, 4
          %s278 = int_to_ptr.hbm [resolvable:$true] %s277
          %s279 = sshll.u32 %s268, 4
          %s280 = int_to_ptr.vmem [resolvable:$true] %s279
          %282 = dma.hbm_to_vmem [thread:$0]  %s278, 128, %s280, %s265
        $region40: #{tpu_custom_call.1} parent=35 // pred_fallthru
          _
      $region36: #{tpu_custom_call.1} parent=5 // pred_fallthru
        _
      %p283 = scmp.le.s32.totalorder 1, %s18
      %p284 = scmp.lt.s32.totalorder %s18, 3
      %p285 = pnand %p283, %p284
      %p286 = pneg %p285
      // Predicated region
      $region41: #{tpu_custom_call.1} parent=5 // pred_check
        _
      $region42: #{tpu_custom_call.1} parent=5 // pred_check_branch
        %288 = sbr.rel (%p285) target = $region44
      $region43: #{tpu_custom_call.1} parent=5 // pred_region
        %s289 = ssub.s32 %s18, 1
        %s290 = sand.u32 %s170, 1
        %s291 = scalar_lea.sflag [#allocation3], %s290
        %s292 = sand.u32 %s170, 1
        %s293 = smul.addr %s292, 8
        %s294 = scalar_lea.vmem [#allocation2], %s293
        // Predicated region
        $region45: #{tpu_custom_call.1} parent=43 // pred_check
          %p295 = pneg %p183
        $region46: #{tpu_custom_call.1} parent=43 // pred_check_branch
          %297 = sbr.rel (%p295) target = $region48
        $region47: #{tpu_custom_call.1} parent=43 // pred_region
          %299 = dma.done %s291, 128
        $region48: #{tpu_custom_call.1} parent=43 // pred_fallthru
          _
        %p300 = scmp.lt.s32.totalorder %s28, 0
        %s301 = scalar_select %p300, %s28, 0
        %s302 = smul.addr %s301, 4
        %s303 = scalar_lea.vmem %s0, %s302
        %p304 = pneg %p56
        %p305 = pneg %p53
        %p306 = scmp.lt.s32.totalorder %s28, 0
        %s307 = scalar_select %p306, %s28, 0
        %s308 = smul.addr %s307, 4
        %s309 = scalar_lea.vmem %s1, %s308
        %p310 = pneg %p82
        %p311 = pneg %p79
        %p312 = scmp.lt.s32.totalorder %s28, 0
        %s313 = scalar_select %p312, %s28, 0
        %s314 = smul.addr %s313, 4
        %s315 = scalar_lea.vmem %s2, %s314
        %p316 = pneg %p108
        %p317 = pneg %p105
        %p318 = scmp.lt.s32.totalorder %s28, 0
        %s319 = scalar_select %p318, %s28, 0
        %s320 = smul.addr %s319, 4
        %s321 = scalar_lea.vmem %s3, %s320
        %p322 = pneg %p134
        %p323 = pneg %p131
        %p324 = pneg %p155
        %p325 = pneg %p152
        %s326 = sand.u32 %s170, 1
        %s327 = scalar_lea.sflag [#allocation3], %s326
        %s328 = sand.u32 %s170, 1
        %s329 = smul.addr %s328, 8
        %s330 = scalar_lea.vmem [#allocation2], %s329
        %p331 = pneg %p183
        %p332 = pneg %p180
        %p333 = pneg %p211
        %p334 = pneg %p208
        %s335 = sand.u32 %s198, 1
        %s336 = scalar_lea.sflag [#allocation4], %s335
        %s337 = sand.u32 %s198, 1
        %s338 = smul.addr %s337, 8
        %s339 = scalar_lea.vmem [#allocation5], %s338
        %p340 = scmp.lt.s32.totalorder %s28, 0
        %s341 = scalar_select %p340, %s28, 0
        %s342 = smul.addr %s341, 4
        %s343 = scalar_lea.vmem %s0, %s342
        %p344 = scmp.lt.s32.totalorder %s28, 0
        %s345 = scalar_select %p344, %s28, 0
        %s346 = smul.addr %s345, 4
        %s347 = scalar_lea.vmem %s1, %s346
        %p348 = scmp.lt.s32.totalorder %s28, 0
        %s349 = scalar_select %p348, %s28, 0
        %s350 = smul.addr %s349, 4
        %s351 = scalar_lea.vmem %s2, %s350
        %p352 = scmp.lt.s32.totalorder %s28, 0
        %s353 = scalar_select %p352, %s28, 0
        %s354 = smul.addr %s353, 4
        %s355 = scalar_lea.vmem %s3, %s354
        %v356 = vld [vmem:[%s294] sm:$0xff]
        %v357 = vld [vmem:[%s343] sm:$0xf]
        %v358 = vld [vmem:[%s347] sm:$0xf]
        %v359 = vld [vmem:[%s351] sm:$0xf]
        %v360 = vld [vmem:[%s355] sm:$0xf]
        %v361 = vld [vmem:[%s4] ss:$2 sm:$0x3]
        %s362 = scalar_lea.vmem %s4, 1
        %v363 = vld [vmem:[%s362] ss:$2 sm:$0x3]
        %365 = vst [vmem:[#allocation1] ss:$2 sm:$0xff] %v356
        %v366 = vld.sshfl [vmem:[#allocation1] sm:$0xff pattern:$0x75316420]
        %v367 = vld.sshfl [vmem:[#allocation1 + $0x8] sm:$0xff pattern:$0x75316420]
        %368 = vrot.lane.b32.xlu0 %v366, 17
        %v369 = vpop.permute.xlu0 %368
        %370 = vrot.lane.b32.xlu0 %v367, 17
        %v371 = vpop.permute.xlu0 %370
        %vm372 = vcmask 138240
        %v373 = vsel %vm372, %v369, %v371
        %v377 = vsel %vm372, 0.0, %v369
        %v378 = vsel %vm372, %v371, 0.0
        %v380 = vperm.slane %v361, 0
        %v381 = vperm.slane %v361, 1
        %v384 = vmul.f32 %v377, %v380
        %v385 = vmul.f32 %v373, %v381
        %387 = vset.pattern.permute.xlu0 0
        %388 = vperm.xlu0 %387, %v357
        %v389 = vpop.permute.xlu0 %388
        %v391 = vmul.f32 %v384, %v389
        %v392 = vmul.f32 %v385, %v389
        %v393 = vadd.f32 %v391, 0.0
        %v394 = vadd.f32 %v392, 0.0
        %395 = vset.pattern.permute.xlu0 1
        %396 = vperm.xlu0 %395, %v357
        %v397 = vpop.permute.xlu0 %396
        %v399 = vmul.f32 %v377, %v397
        %v400 = vmul.f32 %v373, %v397
        %v401 = vmul.f32 %v378, %v397
        %405 = vrot.lane.b32.xlu0 %v399, 127
        %v406 = vpop.permute.xlu0 %405
        %407 = vrot.lane.b32.xlu0 %v400, 127
        %v408 = vpop.permute.xlu0 %407
        %409 = vrot.lane.b32.xlu0 %v401, 127
        %v410 = vpop.permute.xlu0 %409
        %vm411 = vcmask 1039360
        %v412 = vsel %vm411, %v406, %v408
        %v413 = vsel %vm411, %v408, %v410
        %v416 = vadd.f32 %v393, %v412
        %v417 = vadd.f32 %v394, %v413
        %v419 = vperm.slane %v363, 0
        %v420 = vperm.slane %v363, 1
        %421 = vrot.lane.b32.xlu0 %v419, 2
        %v422 = vpop.permute.xlu0 %421
        %423 = vrot.lane.b32.xlu0 %v420, 2
        %v424 = vpop.permute.xlu0 %423
        %vm425 = vcmask 15360
        %v426 = vsel %vm425, %v422, %v424
        %v430 = vmul.f32 %v377, %v422
        %v431 = vmul.f32 %v373, %v426
        %v432 = vmul.f32 %v378, %v424
        %433 = vset.pattern.permute.xlu0 2
        %434 = vperm.xlu0 %433, %v357
        %v435 = vpop.permute.xlu0 %434
        %v437 = vmul.f32 %v430, %v435
        %v438 = vmul.f32 %v431, %v435
        %v439 = vmul.f32 %v432, %v435
        %443 = vrot.lane.b32.xlu0 %v437, 126
        %v444 = vpop.permute.xlu0 %443
        %445 = vrot.lane.b32.xlu0 %v438, 126
        %v446 = vpop.permute.xlu0 %445
        %447 = vrot.lane.b32.xlu0 %v439, 126
        %v448 = vpop.permute.xlu0 %447
        %vm449 = vcmask 1031168
        %v450 = vsel %vm449, %v444, %v446
        %v451 = vsel %vm449, %v446, %v448
        %v454 = vadd.f32 %v416, %v450
        %v455 = vadd.f32 %v417, %v451
        %456 = vrot.lane.b32.xlu0 %v380, 16
        %v457 = vpop.permute.xlu0 %456
        %458 = vrot.lane.b32.xlu0 %v381, 16
        %v459 = vpop.permute.xlu0 %458
        %vm460 = vcmask 130048
        %v461 = vsel %vm460, %v457, %v459
        %v465 = vmul.f32 %v377, %v457
        %v466 = vmul.f32 %v373, %v461
        %v467 = vmul.f32 %v378, %v459
        %468 = vset.pattern.permute.xlu0 3
        %469 = vperm.xlu0 %468, %v357
        %v470 = vpop.permute.xlu0 %469
        %v472 = vmul.f32 %v465, %v470
        %v473 = vmul.f32 %v466, %v470
        %v474 = vmul.f32 %v467, %v470
        %478 = vrot.lane.b32.xlu0 %v472, 112
        %v479 = vpop.permute.xlu0 %478
        %480 = vrot.lane.b32.xlu0 %v473, 112
        %v481 = vpop.permute.xlu0 %480
        %482 = vrot.lane.b32.xlu0 %v474, 112
        %v483 = vpop.permute.xlu0 %482
        %vm484 = vcmask 916480
        %v485 = vsel %vm484, %v479, %v481
        %v486 = vsel %vm484, %v481, %v483
        %v489 = vadd.f32 %v454, %v485
        %v490 = vadd.f32 %v455, %v486
        %491 = vset.pattern.permute.xlu0 4
        %492 = vperm.xlu0 %491, %v357
        %v493 = vpop.permute.xlu0 %492
        %v495 = vmul.f32 %v377, %v493
        %v496 = vmul.f32 %v373, %v493
        %v497 = vmul.f32 %v378, %v493
        %501 = vrot.lane.b32.xlu0 %v495, 111
        %v502 = vpop.permute.xlu0 %501
        %503 = vrot.lane.b32.xlu0 %v496, 111
        %v504 = vpop.permute.xlu0 %503
        %505 = vrot.lane.b32.xlu0 %v497, 111
        %v506 = vpop.permute.xlu0 %505
        %vm507 = vcmask 908288
        %v508 = vsel %vm507, %v502, %v504
        %v509 = vsel %vm507, %v504, %v506
        %v512 = vadd.f32 %v489, %v508
        %v513 = vadd.f32 %v490, %v509
        %514 = vrot.lane.b32.xlu0 %v419, 18
        %v515 = vpop.permute.xlu0 %514
        %516 = vrot.lane.b32.xlu0 %v420, 18
        %v517 = vpop.permute.xlu0 %516
        %vm518 = vcmask 146432
        %v519 = vsel %vm518, %v515, %v517
        %v523 = vmul.f32 %v377, %v515
        %v524 = vmul.f32 %v373, %v519
        %v525 = vmul.f32 %v378, %v517
        %526 = vset.pattern.permute.xlu0 5
        %527 = vperm.xlu0 %526, %v357
        %v528 = vpop.permute.xlu0 %527
        %v530 = vmul.f32 %v523, %v528
        %v531 = vmul.f32 %v524, %v528
        %v532 = vmul.f32 %v525, %v528
        %536 = vrot.lane.b32.xlu0 %v530, 110
        %v537 = vpop.permute.xlu0 %536
        %538 = vrot.lane.b32.xlu0 %v531, 110
        %v539 = vpop.permute.xlu0 %538
        %540 = vrot.lane.b32.xlu0 %v532, 110
        %v541 = vpop.permute.xlu0 %540
        %vm542 = vcmask 900096
        %v543 = vsel %vm542, %v537, %v539
        %v544 = vsel %vm542, %v539, %v541
        %v547 = vadd.f32 %v512, %v543
        %v548 = vadd.f32 %v513, %v544
        %549 = vrot.lane.b32.xlu0 %v380, 32
        %v550 = vpop.permute.xlu0 %549
        %551 = vrot.lane.b32.xlu0 %v381, 32
        %v552 = vpop.permute.xlu0 %551
        %vm553 = vcmask 261120
        %v554 = vsel %vm553, %v550, %v552
        %v558 = vmul.f32 %v377, %v550
        %v559 = vmul.f32 %v373, %v554
        %v560 = vmul.f32 %v378, %v552
        %561 = vset.pattern.permute.xlu0 6
        %562 = vperm.xlu0 %561, %v357
        %v563 = vpop.permute.xlu0 %562
        %v565 = vmul.f32 %v558, %v563
        %v566 = vmul.f32 %v559, %v563
        %v567 = vmul.f32 %v560, %v563
        %571 = vrot.lane.b32.xlu0 %v565, 96
        %v572 = vpop.permute.xlu0 %571
        %573 = vrot.lane.b32.xlu0 %v566, 96
        %v574 = vpop.permute.xlu0 %573
        %575 = vrot.lane.b32.xlu0 %v567, 96
        %v576 = vpop.permute.xlu0 %575
        %vm577 = vcmask 785408
        %v578 = vsel %vm577, %v572, %v574
        %v579 = vsel %vm577, %v574, %v576
        %v582 = vadd.f32 %v547, %v578
        %v583 = vadd.f32 %v548, %v579
        %584 = vset.pattern.permute.xlu0 7
        %585 = vperm.xlu0 %584, %v357
        %v586 = vpop.permute.xlu0 %585
        %v588 = vmul.f32 %v377, %v586
        %v589 = vmul.f32 %v373, %v586
        %v590 = vmul.f32 %v378, %v586
        %594 = vrot.lane.b32.xlu0 %v588, 95
        %v595 = vpop.permute.xlu0 %594
        %596 = vrot.lane.b32.xlu0 %v589, 95
        %v597 = vpop.permute.xlu0 %596
        %598 = vrot.lane.b32.xlu0 %v590, 95
        %v599 = vpop.permute.xlu0 %598
        %vm600 = vcmask 777216
        %v601 = vsel %vm600, %v595, %v597
        %v602 = vsel %vm600, %v597, %v599
        %v605 = vadd.f32 %v582, %v601
        %v606 = vadd.f32 %v583, %v602
        %607 = vrot.lane.b32.xlu0 %v419, 34
        %v608 = vpop.permute.xlu0 %607
        %609 = vrot.lane.b32.xlu0 %v420, 34
        %v610 = vpop.permute.xlu0 %609
        %vm611 = vcmask 277504
        %v612 = vsel %vm611, %v608, %v610
        %v616 = vmul.f32 %v377, %v608
        %v617 = vmul.f32 %v373, %v612
        %v618 = vmul.f32 %v378, %v610
        %619 = vset.pattern.permute.xlu0 8
        %620 = vperm.xlu0 %619, %v357
        %v621 = vpop.permute.xlu0 %620
        %v623 = vmul.f32 %v616, %v621
        %v624 = vmul.f32 %v617, %v621
        %v625 = vmul.f32 %v618, %v621
        %629 = vrot.lane.b32.xlu0 %v623, 94
        %v630 = vpop.permute.xlu0 %629
        %631 = vrot.lane.b32.xlu0 %v624, 94
        %v632 = vpop.permute.xlu0 %631
        %633 = vrot.lane.b32.xlu0 %v625, 94
        %v634 = vpop.permute.xlu0 %633
        %vm635 = vcmask 769024
        %v636 = vsel %vm635, %v630, %v632
        %v637 = vsel %vm635, %v632, %v634
        %v640 = vadd.f32 %v605, %v636
        %v641 = vadd.f32 %v606, %v637
        %643 = vset.pattern.permute.xlu0 0
        %644 = vperm.xlu0 %643, %v358
        %v645 = vpop.permute.xlu0 %644
        %v647 = vadd.f32 %v640, %v645
        %v648 = vadd.f32 %v641, %v645
        %v649 = vmul.f32 %v647, 0.5
        %v650 = vmul.f32 %v648, 0.5
        %v651 = vmul.f32 %v647, 0.70710677
        %v652 = vmul.f32 %v648, 0.70710677
        %v653 = vmul.f32 %v651, %v651
        %v654 = vmin.f32 16.0, %v653
        %v655 = vmul.f32 %v654, 2.1237322e-06
        %v656 = vadd.f32 %v655, 0.00028619796
        %v657 = vmul.f32 %v654, %v656
        %v658 = vadd.f32 %v657, 0.0036580483
        %v659 = vmul.f32 %v654, %v658
        %v660 = vadd.f32 %v659, 0.05243302
        %v661 = vmul.f32 %v654, %v660
        %v662 = vadd.f32 %v661, 0.18741608
        %v663 = vmul.f32 %v654, %v662
        %v664 = vadd.f32 %v663, 1.1283791
        %v665 = vmul.f32 %v651, %v664
        %v666 = vmul.f32 %v654, 3.8918573e-05
        %v667 = vadd.f32 %v666, 0.001143296
        %v668 = vmul.f32 %v654, %v667
        %v669 = vadd.f32 %v668, 0.014752088
        %v670 = vmul.f32 %v654, %v669
        %v671 = vadd.f32 %v670, 0.112945676
        %v672 = vmul.f32 %v654, %v671
        %v673 = vadd.f32 %v672, 0.4994258
        %v674 = vmul.f32 %v654, %v673
        %v675 = vadd.f32 %v674, 1.0
        %v676 = vrcp.pop %v675
        %v677 = vmul.f32 %v675, %v676
        %v678 = vsub.f32 1.0, %v677
        %v679 = vmul.f32 %v676, %v678
        %v680 = vadd.f32 %v676, %v679
        %vm681 = vweird.f32 %v675
        %vm682 = vweird.f32 %v676
        %vm683 = vmor %vm681, %vm682
        %v684 = vsel %vm683, %v676, %v680
        %v685 = vand.u32 2147483647, %v675
        %vm686 = vcmp.eq.f32.partialorder %v685, 8.507059e+37
        %v687 = vand.u32 %v675, 2147483648
        %v688 = vor.u32 1.1754944e-38, %v687
        %v689 = vsel %vm686, %v688, %v684
        %v690 = vmul.f32 %v665, %v689
        %v691 = vmin.f32 %v690, 1.0
        %v692 = vmax.f32 %v691, -1.0
        %v693 = vmul.f32 %v652, %v652
        %v694 = vmin.f32 16.0, %v693
        %v695 = vmul.f32 %v694, 2.1237322e-06
        %v696 = vadd.f32 %v695, 0.00028619796
        %v697 = vmul.f32 %v694, %v696
        %v698 = vadd.f32 %v697, 0.0036580483
        %v699 = vmul.f32 %v694, %v698
        %v700 = vadd.f32 %v699, 0.05243302
        %v701 = vmul.f32 %v694, %v700
        %v702 = vadd.f32 %v701, 0.18741608
        %v703 = vmul.f32 %v694, %v702
        %v704 = vadd.f32 %v703, 1.1283791
        %v705 = vmul.f32 %v652, %v704
        %v706 = vmul.f32 %v694, 3.8918573e-05
        %v707 = vadd.f32 %v706, 0.001143296
        %v708 = vmul.f32 %v694, %v707
        %v709 = vadd.f32 %v708, 0.014752088
        %v710 = vmul.f32 %v694, %v709
        %v711 = vadd.f32 %v710, 0.112945676
        %v712 = vmul.f32 %v694, %v711
        %v713 = vadd.f32 %v712, 0.4994258
        %v714 = vmul.f32 %v694, %v713
        %v715 = vadd.f32 %v714, 1.0
        %v716 = vrcp.pop %v715
        %v717 = vmul.f32 %v715, %v716
        %v718 = vsub.f32 1.0, %v717
        %v719 = vmul.f32 %v716, %v718
        %v720 = vadd.f32 %v716, %v719
        %vm721 = vweird.f32 %v715
        %vm722 = vweird.f32 %v716
        %vm723 = vmor %vm721, %vm722
        %v724 = vsel %vm723, %v716, %v720
        %v725 = vand.u32 2147483647, %v715
        %vm726 = vcmp.eq.f32.partialorder %v725, 8.507059e+37
        %v727 = vand.u32 %v715, 2147483648
        %v728 = vor.u32 1.1754944e-38, %v727
        %v729 = vsel %vm726, %v728, %v724
        %v730 = vmul.f32 %v705, %v729
        %v731 = vmin.f32 %v730, 1.0
        %v732 = vmax.f32 %v731, -1.0
        %v733 = vadd.f32 %v692, 1.0
        %v734 = vadd.f32 %v732, 1.0
        %v735 = vmul.f32 %v649, %v733
        %v736 = vmul.f32 %v650, %v734
        %738 = vset.pattern.permute.xlu0 0
        %739 = vperm.xlu0 %738, %v359
        %v740 = vpop.permute.xlu0 %739
        %v742 = vmul.f32 %v735, %v740
        %v743 = vmul.f32 %v736, %v740
        %745 = vset.pattern.permute.xlu0 0
        %746 = vperm.xlu0 %745, %v360
        %v747 = vpop.permute.xlu0 %746
        %v749 = vadd.f32 %v742, %v747
        %v750 = vadd.f32 %v743, %v747
        %751 = vst [vmem:[#allocation1] ss:$2 sm:$0xff] %v356
        %v752 = vld.sshfl [vmem:[#allocation1] sm:$0xff pattern:$0x75316420]
        %v753 = vld.sshfl [vmem:[#allocation1 + $0x8] sm:$0xff pattern:$0x75316420]
        %v756 = vadd.f32 %v749, %v752
        %v757 = vadd.f32 %v750, %v753
        %v760 = vrot.slane %v757, 4
        %vm761 = vcmask 1043456
        %v762 = vsel %vm761, %v756, %v760
        %764 = vst [vmem:[%s339] sm:$0xff] %v762
        %s765 = sand.u32 %s198, 1
        %s766 = scalar_lea.sflag [#allocation4], %s765
        %s767 = sand.u32 %s198, 1
        %s768 = smul.addr %s767, 8
        %s769 = scalar_lea.vmem [#allocation5], %s768
        // Predicated region
        $region49: #{tpu_custom_call.1} parent=43 // pred_check
          %p770 = pneg %p208
        $region50: #{tpu_custom_call.1} parent=43 // pred_check_branch
          %772 = sbr.rel (%p770) target = $region52
        $region51: #{tpu_custom_call.1} parent=43 // pred_region
          %774 = vsyncadd %s766, 0
          %s775 = smul.addr %s28, 2
          %s776 = smul.addr %s27, 2
          %s777 = sadd.s32 %s775, %s776
          %s778 = smul.addr %s777, 4
          %s779 = scalar_lea.hbm %s6, %s778
          %s781 = sshll.u32 %s769, 4
          %s782 = int_to_ptr.vmem [resolvable:$true] %s781
          %s783 = sshll.u32 %s779, 4
          %s784 = int_to_ptr.hbm [resolvable:$true] %s783
          %786 = dma.vmem_to_hbm [thread:$0]  %s782, 128, %s784, %s766
        $region52: #{tpu_custom_call.1} parent=43 // pred_fallthru
          _
      $region44: #{tpu_custom_call.1} parent=5 // pred_fallthru
        _
      %p787 = scmp.le.s32.totalorder 2, %s18
      // Predicated region
      $region53: #{tpu_custom_call.1} parent=5 // pred_check
        %p788 = pneg %p787
      $region54: #{tpu_custom_call.1} parent=5 // pred_check_branch
        %790 = sbr.rel (%p788) target = $region56
      $region55: #{tpu_custom_call.1} parent=5 // pred_region
        %s791 = ssub.s32 %s18, 2
        // Predicated region
        $region57: #{tpu_custom_call.1} parent=55 // pred_check
          %p792 = pneg %p214
        $region58: #{tpu_custom_call.1} parent=55 // pred_check_branch
          %794 = sbr.rel (%p792) target = $region60
        $region59: #{tpu_custom_call.1} parent=55 // pred_region
          %s795 = sand.u32 %s199, 1
          %s796 = scalar_lea.sflag [#allocation4], %s795
          %s797 = sand.u32 %s199, 1
          %s798 = smul.addr %s797, 8
          %s799 = scalar_lea.vmem [#allocation5], %s798
          %801 = dma.done %s796, 128
        $region60: #{tpu_custom_call.1} parent=55 // pred_fallthru
          _
      $region56: #{tpu_custom_call.1} parent=5 // pred_fallthru
        _
    $region6: #{tpu_custom_call.1} parent=1 // loop_footer
      %s22 = sadd.s32 1, %s18
    $region7: #{tpu_custom_call.1} parent=1 // loop_footer_branch
      %17 = sbr.rel target = $region3
    $region8: #{tpu_custom_call.1} parent=1 // loop_exit
      _
    %802 = vsyncpa [#allocation3], 1
    %s803 = scalar_lea.sflag [#allocation3], 1
    %804 = vsyncpa %s803, 1
    %805 = vsyncpa [#allocation4], 1
    %s806 = scalar_lea.sflag [#allocation4], 1
    %807 = vsyncpa %s806, 1

</llo_original>
